<compile_context>
chip_gen: v7x
topology: tpu7x:2x2x1
jax: 0.10.0
libtpu: 0.0.40
codegen_flags: <defaults>
</compile_context>

<pallas_src>
import functools

import jax
import jax.numpy as jnp
from jax.experimental import pallas as pl
from jax.experimental.pallas import tpu as pltpu


# ----------------------------------------------------------------------------
# Kernel
# ----------------------------------------------------------------------------
def _fused_fcnet_kernel(hidden, split_l2,
                        x_ref, w1_ref, b1_ref, w2_ref, b2_ref, w3_ref, b3_ref,
                        out_ref):
    """Policy + value branches fused into three lane-dense matmuls.

    x_ref : [TB, obs_dim]  bf16 (streamed)
    w*_ref: bf16 resident weights, b*_ref: f32 resident biases
    out   : [TB, n_pad]    f32 lane-dense slab (logits | value | zero pad)
    """
    x = x_ref[...]                                                  # bf16

    # Layer 1: concat(policy | value) -> one [obs_dim, 2H] matmul.
    h1 = jnp.tanh(
        jnp.dot(x, w1_ref[...], preferred_element_type=jnp.float32) + b1_ref[...]
    )                                                               # [TB, 2H] f32
    h1 = h1.astype(x.dtype)

    # Layer 2: block-diagonal fused (H2 <= 128) or two lane-aligned dots.
    if split_l2:
        hp = jnp.dot(h1[:, :hidden], w2_ref[0],
                     preferred_element_type=jnp.float32)            # [TB, H]
        hv = jnp.dot(h1[:, hidden:], w2_ref[1],
                     preferred_element_type=jnp.float32)            # [TB, H]
        h2 = jnp.tanh(jnp.concatenate([hp, hv], axis=1) + b2_ref[...])
    else:
        h2 = jnp.tanh(
            jnp.dot(h1, w2_ref[...], preferred_element_type=jnp.float32)
            + b2_ref[...]
        )                                                           # [TB, 2H] f32
    h2 = h2.astype(x.dtype)

    # Layer 3: block placement into the padded 128-lane output slab.
    out_ref[...] = (
        jnp.dot(h2, w3_ref[...], preferred_element_type=jnp.float32) + b3_ref[...]
    )


# ----------------------------------------------------------------------------
# One-time parameter packing (outside the kernel)
# ----------------------------------------------------------------------------
def pack_params(params, *, compute_dtype=jnp.bfloat16):
    """Fuse policy + value branch weights into lane-dense shared matrices.

    Weights are cast to `compute_dtype` (bf16 MXU inputs); biases stay f32.
    Padded output lanes are exactly zero and get sliced off in the wrapper.
    """
    w1, b1, w2, b2, w3, b3 = (params[k] for k in ("w1", "b1", "w2", "b2", "w3", "b3"))
    vw1, vb1, vw2, vb2, vw3, vb3 = (
        params[k] for k in ("vw1", "vb1", "vw2", "vb2", "vw3", "vb3"))

    H = w2.shape[0]
    H2 = 2 * H
    num_outputs = w3.shape[1]
    n_pad = max(128, ((num_outputs + 1 + 127) // 128) * 128)  # minimum lane-dense width

    # Layer 1: concat along output axis -> one [obs_dim, 2H] matmul.
    W1 = jnp.concatenate([w1, vw1], axis=1).astype(compute_dtype)
    B1 = jnp.concatenate([b1, vb1], axis=1).astype(jnp.float32)

    # Layer 2: block-diag only while the zero blocks ride free on the MXU/lanes.
    split_l2 = H2 > 128
    if split_l2:
        W2 = jnp.stack([w2, vw2], axis=0).astype(compute_dtype)     # [2, H, H]
    else:
        zhh = jnp.zeros((H, H), jnp.float32)
        W2 = jnp.concatenate(
            [jnp.concatenate([w2, zhh], axis=1),
             jnp.concatenate([zhh, vw2], axis=1)], axis=0).astype(compute_dtype)
    B2 = jnp.concatenate([b2, vb2], axis=1).astype(jnp.float32)

    # Layer 3: block placement + zero-pad lanes to n_pad.
    W3 = jnp.zeros((H2, n_pad), jnp.float32)
    W3 = W3.at[:H, :num_outputs].set(w3)
    W3 = W3.at[H:, num_outputs:num_outputs + 1].set(vw3)
    W3 = W3.astype(compute_dtype)
    B3 = jnp.zeros((1, n_pad), jnp.float32)
    B3 = B3.at[:, :num_outputs].set(b3)
    B3 = B3.at[:, num_outputs:num_outputs + 1].set(vb3)

    return dict(W1=W1, B1=B1, W2=W2, B2=B2, W3=W3, B3=B3,
                hidden=H, num_outputs=num_outputs, split_l2=split_l2,
                compute_dtype=compute_dtype)


# ----------------------------------------------------------------------------
# Batch-tile selection (v7x megacore + VMEM budget aware)
# ----------------------------------------------------------------------------
def _pick_batch_tile(B, obs_dim, H2, n_pad, itemsize):
    TB_MAX = 4096
    # Per-row VMEM (double-buffered x + out tiles, f32 intermediates headroom).
    per_row = 2 * obs_dim * itemsize + 2 * n_pad * 4 + 3 * H2 * 4
    tb_cap = max(8, min(TB_MAX, ((16 << 20) // per_row) // 8 * 8))
    if B < 16:
        return B, per_row                       # single full tile (sublane rule)
    # >= 2 grid steps so both v7x TensorCores get work; tiles kept large.
    tb = min(tb_cap, ((-(-B // 2)) + 7) // 8 * 8)
    return tb, per_row


# ----------------------------------------------------------------------------
# Wrappers
# ----------------------------------------------------------------------------
def torch_custom_model_forward_packed(x, packed):
    """Fused FC net in one Pallas call; returns the lane-dense [B, n_pad] slab.

    Prefer consuming this slab downstream (lanes [0:num_outputs] = logits,
    lane num_outputs = value) to avoid extra slice copies of the output.
    """
    cd = packed["compute_dtype"]
    B, obs_dim = x.shape
    H = packed["hidden"]
    H2 = 2 * H
    n_pad = packed["W3"].shape[1]
    split_l2 = packed["split_l2"]

    # Mirror input_dict["obs"].float(), then feed the MXU in bf16.
    x = x.astype(jnp.float32).astype(cd)
    itemsize = jnp.dtype(cd).itemsize

    TB, per_row = _pick_batch_tile(B, obs_dim, H2, n_pad, itemsize)
    grid = (pl.cdiv(B, TB),)

    w2_shape = packed["W2"].shape
    w2_elems = packed["W2"].size
    weight_bytes = (obs_dim * H2 + w2_elems + H2 * n_pad) * itemsize
    bias_bytes = (2 * H2 + n_pad) * 4
    vmem_limit = int(min(48 << 20,
                         max(TB * per_row + weight_bytes + bias_bytes + (2 << 20),
                             16 << 20)))

    def _resident(shape):
        # Constant block index -> single-buffer it (second buffer is dead VMEM).
        return pl.BlockSpec(shape, lambda i, _n=len(shape): (0,) * _n,
                            pipeline_mode=pl.Buffered(1))

    # Advisory cost estimate for XLA scheduling around the custom call.
    flops = 2 * B * (obs_dim * H2 + w2_elems + H2 * n_pad)
    transcendentals = 2 * B * H2
    bytes_accessed = (B * obs_dim * itemsize + B * n_pad * 4
                      + weight_bytes + bias_bytes)

    kernel = functools.partial(_fused_fcnet_kernel, H, split_l2)

    out = pl.pallas_call(
        kernel,
        out_shape=jax.ShapeDtypeStruct((B, n_pad), jnp.float32),
        grid_spec=pltpu.PrefetchScalarGridSpec(
            num_scalar_prefetch=0,
            grid=grid,
            in_specs=[
                pl.BlockSpec((TB, obs_dim), lambda i: (i, 0)),   # x streamed
                _resident((obs_dim, H2)),                        # W1 resident
                _resident((1, H2)),                              # B1
                _resident(w2_shape),                             # W2 ([2H,2H] or [2,H,H])
                _resident((1, H2)),                              # B2
                _resident((H2, n_pad)),                          # W3
                _resident((1, n_pad)),                           # B3
            ],
            out_specs=pl.BlockSpec((TB, n_pad), lambda i: (i, 0)),  # lane-dense slab
        ),
        compiler_params=pltpu.CompilerParams(
            dimension_semantics=(pltpu.PARALLEL,),
            vmem_limit_bytes=vmem_limit),
        cost_estimate=pl.CostEstimate(
            flops=flops,
            transcendentals=transcendentals,
            bytes_accessed=bytes_accessed),
    )(x, packed["W1"], packed["B1"], packed["W2"], packed["B2"],
      packed["W3"], packed["B3"])
    return out


def torch_custom_model_forward(x, packed):
    """Returns (logits [B, num_outputs], value [B]) like forward()+value_function().

    NOTE: slices below re-read the output slab; latency-critical callers should
    use torch_custom_model_forward_packed() and slice lazily downstream.
    """
    num_outputs = packed["num_outputs"]
    out = torch_custom_model_forward_packed(x, packed)
    logits = out[:, :num_outputs]
    value = out[:, num_outputs]          # value_function(): reshape([-1]) -> [B]
    return logits, value


# ----------------------------------------------------------------------------
# Synthetic init + pure-JAX reference
# ----------------------------------------------------------------------------
def _init_params(key, obs_dim, hidden, num_outputs):
    """Deterministic synthetic init matching TorchFC layer shapes
    (fcnet_hiddens=[hidden, hidden], tanh activation, separate value branch)."""
    ks = jax.random.split(key, 12)

    def lin(kw, kb, fan_in, fan_out):
        scale = 1.0 / jnp.sqrt(jnp.float32(fan_in))
        w = jax.random.uniform(kw, (fan_in, fan_out), jnp.float32, -scale, scale)
        b = jax.random.uniform(kb, (1, fan_out), jnp.float32, -scale, scale)
        return w, b

    w1, b1 = lin(ks[0], ks[1], obs_dim, hidden)
    w2, b2 = lin(ks[2], ks[3], hidden, hidden)
    w3, b3 = lin(ks[4], ks[5], hidden, num_outputs)
    vw1, vb1 = lin(ks[6], ks[7], obs_dim, hidden)
    vw2, vb2 = lin(ks[8], ks[9], hidden, hidden)
    vw3, vb3 = lin(ks[10], ks[11], hidden, 1)
    return dict(
        w1=w1, b1=b1, w2=w2, b2=b2, w3=w3, b3=b3,
        vw1=vw1, vb1=vb1, vw2=vw2, vb2=vb2, vw3=vw3, vb3=vb3,
    )


def _reference(x, p):
    h1 = jnp.tanh(x @ p["w1"] + p["b1"])
    h2 = jnp.tanh(h1 @ p["w2"] + p["b2"])
    logits = h2 @ p["w3"] + p["b3"]
    v1 = jnp.tanh(x @ p["vw1"] + p["vb1"])
    v2 = jnp.tanh(v1 @ p["vw2"] + p["vb2"])
    value = (v2 @ p["vw3"] + p["vb3"]).reshape(-1)
    return logits, value


if __name__ == "__main__":
    key = jax.random.PRNGKey(0)
    k_obs, k_par = jax.random.split(key)

    B, OBS_DIM, HIDDEN, NUM_OUTPUTS = 8, 32, 64, 4

    # input_dict["obs"].float()
    obs = jax.random.normal(k_obs, (B, OBS_DIM), dtype=jnp.float32)
    params = _init_params(k_par, OBS_DIM, HIDDEN, NUM_OUTPUTS)
    packed = pack_params(params)          # one-time branch-fusion packing (bf16)

    logits, value = jax.block_until_ready(torch_custom_model_forward(obs, packed))

    ref_logits, ref_value = _reference(obs, params)
    assert logits.shape == (B, NUM_OUTPUTS) and logits.dtype == jnp.float32
    assert value.shape == (B,) and value.dtype == jnp.float32
    # bf16 MXU inputs -> relaxed tolerances vs the f32 reference.
    assert jnp.allclose(logits, ref_logits, atol=5e-2, rtol=3e-2)
    assert jnp.allclose(value, ref_value, atol=5e-2, rtol=3e-2)

    print("KERNEL_OK")
</pallas_src>

<mosaic_0001>
module attributes {stable_mosaic.version = 11 : i64} {
  func.func @_fused_fcnet_kernel(%arg0: i32, %arg1: memref<8x32xbf16, #tpu.memory_space<vmem>>, %arg2: memref<32x128xbf16, #tpu.memory_space<vmem>>, %arg3: memref<1x128xf32, #tpu.memory_space<vmem>>, %arg4: memref<128x128xbf16, #tpu.memory_space<vmem>>, %arg5: memref<1x128xf32, #tpu.memory_space<vmem>>, %arg6: memref<128x128xbf16, #tpu.memory_space<vmem>>, %arg7: memref<1x128xf32, #tpu.memory_space<vmem>>, %arg8: memref<8x128xf32, #tpu.memory_space<vmem>>) attributes {dimension_semantics = [#tpu.dimension_semantics<parallel>], iteration_bounds = array<i64: 1>, scalar_prefetch = 0 : i64, scratch_operands = 0 : i64, tpu.core_type = #tpu.core_type<tc>, window_params = [{transform_indices = @transform_0, window_bounds = array<i64: 8, 32>}, {pipeline_mode = #tpu.pipeline_mode<synchronous>, transform_indices = @transform_1, window_bounds = array<i64: 32, 128>}, {pipeline_mode = #tpu.pipeline_mode<synchronous>, transform_indices = @transform_2, window_bounds = array<i64: 1, 128>}, {pipeline_mode = #tpu.pipeline_mode<synchronous>, transform_indices = @transform_3, window_bounds = array<i64: 128, 128>}, {pipeline_mode = #tpu.pipeline_mode<synchronous>, transform_indices = @transform_4, window_bounds = array<i64: 1, 128>}, {pipeline_mode = #tpu.pipeline_mode<synchronous>, transform_indices = @transform_5, window_bounds = array<i64: 128, 128>}, {pipeline_mode = #tpu.pipeline_mode<synchronous>, transform_indices = @transform_6, window_bounds = array<i64: 1, 128>}, {transform_indices = @transform_7, window_bounds = array<i64: 8, 128>}]} {
    %c0 = arith.constant 0 : index
    %c0_0 = arith.constant 0 : index
    %0 = vector.load %arg1[%c0, %c0_0] : memref<8x32xbf16, #tpu.memory_space<vmem>>, vector<8x32xbf16>
    %c0_1 = arith.constant 0 : index
    %c0_2 = arith.constant 0 : index
    %1 = vector.load %arg2[%c0_1, %c0_2] : memref<32x128xbf16, #tpu.memory_space<vmem>>, vector<32x128xbf16>
    %cst = arith.constant dense<0.000000e+00> : vector<8x128xf32>
    %2 = tpu.matmul %0, %1, %cst {dimension_numbers = #tpu.dot_dimension_numbers<[1], [0], [0], [1], [0, 0, 1, 1], [], []>} : vector<8x32xbf16>, vector<32x128xbf16>, vector<8x128xf32> -> vector<8x128xf32>
    %c0_3 = arith.constant 0 : index
    %c0_4 = arith.constant 0 : index
    %3 = vector.load %arg3[%c0_3, %c0_4] : memref<1x128xf32, #tpu.memory_space<vmem>>, vector<1x128xf32>
    %4 = vector.broadcast %3 : vector<1x128xf32> to vector<8x128xf32>
    %5 = arith.addf %2, %4 : vector<8x128xf32>
    %6 = math.tanh %5 : vector<8x128xf32>
    %7 = arith.truncf %6 : vector<8x128xf32> to vector<8x128xbf16>
    %c0_5 = arith.constant 0 : index
    %c0_6 = arith.constant 0 : index
    %8 = vector.load %arg4[%c0_5, %c0_6] : memref<128x128xbf16, #tpu.memory_space<vmem>>, vector<128x128xbf16>
    %cst_7 = arith.constant dense<0.000000e+00> : vector<8x128xf32>
    %9 = tpu.matmul %7, %8, %cst_7 {dimension_numbers = #tpu.dot_dimension_numbers<[1], [0], [0], [1], [0, 0, 1, 1], [], []>} : vector<8x128xbf16>, vector<128x128xbf16>, vector<8x128xf32> -> vector<8x128xf32>
    %c0_8 = arith.constant 0 : index
    %c0_9 = arith.constant 0 : index
    %10 = vector.load %arg5[%c0_8, %c0_9] : memref<1x128xf32, #tpu.memory_space<vmem>>, vector<1x128xf32>
    %11 = vector.broadcast %10 : vector<1x128xf32> to vector<8x128xf32>
    %12 = arith.addf %9, %11 : vector<8x128xf32>
    %13 = math.tanh %12 : vector<8x128xf32>
    %14 = arith.truncf %13 : vector<8x128xf32> to vector<8x128xbf16>
    %c0_10 = arith.constant 0 : index
    %c0_11 = arith.constant 0 : index
    %15 = vector.load %arg6[%c0_10, %c0_11] : memref<128x128xbf16, #tpu.memory_space<vmem>>, vector<128x128xbf16>
    %cst_12 = arith.constant dense<0.000000e+00> : vector<8x128xf32>
    %16 = tpu.matmul %14, %15, %cst_12 {dimension_numbers = #tpu.dot_dimension_numbers<[1], [0], [0], [1], [0, 0, 1, 1], [], []>} : vector<8x128xbf16>, vector<128x128xbf16>, vector<8x128xf32> -> vector<8x128xf32>
    %c0_13 = arith.constant 0 : index
    %c0_14 = arith.constant 0 : index
    %17 = vector.load %arg7[%c0_13, %c0_14] : memref<1x128xf32, #tpu.memory_space<vmem>>, vector<1x128xf32>
    %18 = vector.broadcast %17 : vector<1x128xf32> to vector<8x128xf32>
    %19 = arith.addf %16, %18 : vector<8x128xf32>
    %c0_15 = arith.constant 0 : index
    %c0_16 = arith.constant 0 : index
    %20 = vector.load %arg8[%c0_15, %c0_16] : memref<8x128xf32, #tpu.memory_space<vmem>>, vector<8x128xf32>
    tpu.vector_store %arg8[%c0_15, %c0_16], %19 {strides = array<i32>} : memref<8x128xf32, #tpu.memory_space<vmem>>, vector<8x128xf32>,
    return
  }
  func.func @transform_0(%arg0: i32) -> (i32, i32) {
    %c0_i32 = arith.constant 0 : i32
    %c0_i32_0 = arith.constant 0 : i32
    return %arg0, %c0_i32 : i32, i32
  }
  func.func @transform_1(%arg0: i32) -> (i32, i32) {
    %c0_i32 = arith.constant 0 : i32
    %c0_i32_0 = arith.constant 0 : i32
    %c0_i32_1 = arith.constant 0 : i32
    return %c0_i32, %c0_i32_0 : i32, i32
  }
  func.func @transform_2(%arg0: i32) -> (i32, i32) {
    %c0_i32 = arith.constant 0 : i32
    %c0_i32_0 = arith.constant 0 : i32
    %c0_i32_1 = arith.constant 0 : i32
    return %c0_i32, %c0_i32_0 : i32, i32
  }
  func.func @transform_3(%arg0: i32) -> (i32, i32) {
    %c0_i32 = arith.constant 0 : i32
    %c0_i32_0 = arith.constant 0 : i32
    %c0_i32_1 = arith.constant 0 : i32
    return %c0_i32, %c0_i32_0 : i32, i32
  }
  func.func @transform_4(%arg0: i32) -> (i32, i32) {
    %c0_i32 = arith.constant 0 : i32
    %c0_i32_0 = arith.constant 0 : i32
    %c0_i32_1 = arith.constant 0 : i32
    return %c0_i32, %c0_i32_0 : i32, i32
  }
  func.func @transform_5(%arg0: i32) -> (i32, i32) {
    %c0_i32 = arith.constant 0 : i32
    %c0_i32_0 = arith.constant 0 : i32
    %c0_i32_1 = arith.constant 0 : i32
    return %c0_i32, %c0_i32_0 : i32, i32
  }
  func.func @transform_6(%arg0: i32) -> (i32, i32) {
    %c0_i32 = arith.constant 0 : i32
    %c0_i32_0 = arith.constant 0 : i32
    %c0_i32_1 = arith.constant 0 : i32
    return %c0_i32, %c0_i32_0 : i32, i32
  }
  func.func @transform_7(%arg0: i32) -> (i32, i32) {
    %c0_i32 = arith.constant 0 : i32
    %c0_i32_0 = arith.constant 0 : i32
    return %arg0, %c0_i32 : i32, i32
  }
}

</mosaic_0001>

<llo_original>
// kernel: tpu_custom_call.1
$region0: #{tpu_custom_call.1}
  #allocation0 [shape = 'u32[]', space=smem, size = 0x4, offset = 0x4, fixed_abs, tag = 'smem constant byte address 0x4 - core index']
  #allocation1 [shape = 'u32[144,128]{1,0:T(1,128)}', space=vmem, size = 0x12000, scoped, tag = 'internal scratch']
  %s0 = inlined_call_operand.hbm [shape: bf16[8,32], index: 0, kind: input, shape index: {}]
  %s1 = inlined_call_operand.hbm [shape: bf16[32,128], index: 1, kind: input, shape index: {}]
  %s2 = inlined_call_operand.vmem [shape: f32[1,128], index: 2, kind: input, shape index: {}]
  %s3 = inlined_call_operand.hbm [shape: bf16[128,128], index: 3, kind: input, shape index: {}]
  %s4 = inlined_call_operand.vmem [shape: f32[1,128], index: 4, kind: input, shape index: {}]
  %s5 = inlined_call_operand.hbm [shape: bf16[128,128], index: 5, kind: input, shape index: {}]
  %s6 = inlined_call_operand.vmem [shape: f32[1,128], index: 6, kind: input, shape index: {}]
  %s7 = inlined_call_operand.hbm [shape: f32[8,128], index: 7, kind: output, shape index: {}]
  %s8 = sld [smem:[#allocation0]]
  $region54: #{tpu_custom_call.1} parent=0
    _
  %s10 = ssub.s32 1, %s8
  %s11 = scalar_select 0, %s10, %s8
  $region1: #{tpu_custom_call.1} parent=0
    #allocation2 [shape = 'u8[2048]{0}', space=vmem, size = 0x800, scoped, tag = 'input window, operand 0, single buffered']
    #allocation3 [shape = 's32[1]{0}', space=sflag, size = 0x4, scoped, tag = 'scoped memory for tpu_custom_call.1']
    #allocation4 [shape = 's32[1]{0}', space=sflag, size = 0x4, scoped, tag = 'scoped memory for tpu_custom_call.1']
    #allocation5 [shape = 'u8[8192]{0}', space=vmem, size = 0x2000, scoped, tag = 'input window, operand 1, single buffered']
    #allocation6 [shape = 's32[1]{0}', space=sflag, size = 0x4, scoped, tag = 'scoped memory for tpu_custom_call.1']
    #allocation7 [shape = 'u8[32768]{0}', space=vmem, size = 0x8000, scoped, tag = 'input window, operand 3, single buffered']
    #allocation8 [shape = 'u8[32768]{0}', space=vmem, size = 0x8000, scoped, tag = 'input window, operand 5, single buffered']
    #allocation9 [shape = 's32[1]{0}', space=sflag, size = 0x4, scoped, tag = 'scoped memory for tpu_custom_call.1']
    #allocation10 [shape = 'u8[4096]{0}', space=vmem, size = 0x1000, scoped, tag = 'output window, operand 0, single buffered']
    %12 = vsyncpa [#allocation3], 0
    %13 = vsyncpa [#allocation6], 0
    %14 = vsyncpa [#allocation9], 0
    %15 = vsyncpa [#allocation4], 0
    // Predicated region
    $region2: #{tpu_custom_call.1} parent=1 // pred_check
      _
    $region3: #{tpu_custom_call.1} parent=1 // pred_check_branch
      %17 = sbr.rel (0) target = $region5
    $region4: #{tpu_custom_call.1} parent=1 // pred_region
      %s19 = ssub.s32 64, 64
      %20 = vsyncadd [#allocation3], %s19
      %s22 = sshll.u32 [#allocation2], 4
      %s23 = int_to_ptr.vmem [resolvable:$true] %s22
      %25 = dma.hbm_to_vmem [thread:$0]  %s0, 64, %s23, [#allocation3]
    $region5: #{tpu_custom_call.1} parent=1 // pred_fallthru
      _
    // Predicated region
    $region6: #{tpu_custom_call.1} parent=1 // pred_check
      _
    $region7: #{tpu_custom_call.1} parent=1 // pred_check_branch
      %27 = sbr.rel (0) target = $region9
    $region8: #{tpu_custom_call.1} parent=1 // pred_region
      %s29 = ssub.s32 256, 256
      %30 = vsyncadd [#allocation6], %s29
      %s31 = sshll.u32 [#allocation5], 4
      %s32 = int_to_ptr.vmem [resolvable:$true] %s31
      %37 = dma.hbm_to_vmem [thread:$0]  %s1, 256, %s32, [#allocation6], 64, 64, 4
    $region9: #{tpu_custom_call.1} parent=1 // pred_fallthru
      _
    // Predicated region
    $region10: #{tpu_custom_call.1} parent=1 // pred_check
      _
    $region11: #{tpu_custom_call.1} parent=1 // pred_check_branch
      %39 = sbr.rel (0) target = $region13
    $region12: #{tpu_custom_call.1} parent=1 // pred_region
      _
    $region13: #{tpu_custom_call.1} parent=1 // pred_fallthru
      _
    // Predicated region
    $region14: #{tpu_custom_call.1} parent=1 // pred_check
      _
    $region15: #{tpu_custom_call.1} parent=1 // pred_check_branch
      %41 = sbr.rel (0) target = $region17
    $region16: #{tpu_custom_call.1} parent=1 // pred_region
      %s43 = ssub.s32 1024, 1024
      %44 = vsyncadd [#allocation6], %s43
      %s45 = sshll.u32 [#allocation7], 4
      %s46 = int_to_ptr.vmem [resolvable:$true] %s45
      %51 = dma.hbm_to_vmem [thread:$0]  %s3, 1024, %s46, [#allocation6], 64, 64, 4
    $region17: #{tpu_custom_call.1} parent=1 // pred_fallthru
      _
    // Predicated region
    $region18: #{tpu_custom_call.1} parent=1 // pred_check
      _
    $region19: #{tpu_custom_call.1} parent=1 // pred_check_branch
      %53 = sbr.rel (0) target = $region21
    $region20: #{tpu_custom_call.1} parent=1 // pred_region
      _
    $region21: #{tpu_custom_call.1} parent=1 // pred_fallthru
      _
    // Predicated region
    $region22: #{tpu_custom_call.1} parent=1 // pred_check
      _
    $region23: #{tpu_custom_call.1} parent=1 // pred_check_branch
      %55 = sbr.rel (0) target = $region25
    $region24: #{tpu_custom_call.1} parent=1 // pred_region
      %s57 = ssub.s32 1024, 1024
      %58 = vsyncadd [#allocation9], %s57
      %s59 = sshll.u32 [#allocation8], 4
      %s60 = int_to_ptr.vmem [resolvable:$true] %s59
      %65 = dma.hbm_to_vmem [thread:$0]  %s5, 1024, %s60, [#allocation9], 64, 64, 4
    $region25: #{tpu_custom_call.1} parent=1 // pred_fallthru
      _
    // Predicated region
    $region26: #{tpu_custom_call.1} parent=1 // pred_check
      _
    $region27: #{tpu_custom_call.1} parent=1 // pred_check_branch
      %67 = sbr.rel (0) target = $region29
    $region28: #{tpu_custom_call.1} parent=1 // pred_region
      _
    $region29: #{tpu_custom_call.1} parent=1 // pred_fallthru
      _
    // Predicated region
    $region30: #{tpu_custom_call.1} parent=1 // pred_check
      _
    $region31: #{tpu_custom_call.1} parent=1 // pred_check_branch
      %69 = sbr.rel (0) target = $region33
    $region32: #{tpu_custom_call.1} parent=1 // pred_region
      %70 = dma.done [#allocation3], 64
    $region33: #{tpu_custom_call.1} parent=1 // pred_fallthru
      _
    // Predicated region
    $region34: #{tpu_custom_call.1} parent=1 // pred_check
      _
    $region35: #{tpu_custom_call.1} parent=1 // pred_check_branch
      %72 = sbr.rel (0) target = $region37
    $region36: #{tpu_custom_call.1} parent=1 // pred_region
      %73 = dma.done [#allocation6], 256
    $region37: #{tpu_custom_call.1} parent=1 // pred_fallthru
      _
    // Predicated region
    $region38: #{tpu_custom_call.1} parent=1 // pred_check
      _
    $region39: #{tpu_custom_call.1} parent=1 // pred_check_branch
      %75 = sbr.rel (0) target = $region41
    $region40: #{tpu_custom_call.1} parent=1 // pred_region
      %76 = dma.done [#allocation6], 1024
    $region41: #{tpu_custom_call.1} parent=1 // pred_fallthru
      _
    // Predicated region
    $region42: #{tpu_custom_call.1} parent=1 // pred_check
      _
    $region43: #{tpu_custom_call.1} parent=1 // pred_check_branch
      %78 = sbr.rel (0) target = $region45
    $region44: #{tpu_custom_call.1} parent=1 // pred_region
      %79 = dma.done [#allocation9], 1024
    $region45: #{tpu_custom_call.1} parent=1 // pred_fallthru
      _
    %v81 = vld [vmem:[#allocation2] sm:$0xf]
    %v82 = vld [vmem:[#allocation5] sm:$0xf]
    %v83 = vld [vmem:[#allocation5 + $0x4] sm:$0xf]
    %v84 = vld [vmem:[#allocation5 + $0x8] sm:$0xf]
    %v85 = vld [vmem:[#allocation5 + $0xc] sm:$0xf]
    %v86 = vld [vmem:[%s2] sm:$0x1]
    %v88 = vlaneseq
    %v89 = vshrl.u32 %v88, 7
    %v90 = vsub.s32 0, %v89
    %v91 = vrot.slane %v86, %v90
    %v97 = vunpack.c.l.b16 %v82
    %v98 = vunpack.c.l.b16 %v83
    %v99 = vunpack.c.l.b16 %v84
    %v100 = vunpack.c.l.b16 %v85
    %v101 = vpack.c.b16 %v98, %v97
    %v102 = vpack.c.b16 %v100, %v99
    %vm105 = vcmask 261120
    %v107 = vsel %vm105, %v81, 0
    %109 = vmatprep.subr.bf16.mxu0 0
    %110 = vmatpush1.bf16.msra.mxu0 %v101
    %111 = vmatprep.subr.bf16.mxu0 0
    %112 = vmatpush1.bf16.msra.mxu0 %v102
    %113 = vmatprep.subr.bf16.mxu0 0
    %114 = vmatpush1.bf16.msra.mxu0 0
    %115 = vmatprep.subr.bf16.mxu0 0
    %116 = vmatpush1.bf16.msra.mxu0 0
    %117 = vmatprep.subr.bf16.mxu0 0
    %118 = vmatpush1.bf16.msra.mxu0 0
    %119 = vmatprep.subr.bf16.mxu0 0
    %120 = vmatpush1.bf16.msra.mxu0 0
    %121 = vmatprep.subr.bf16.mxu0 0
    %122 = vmatpush1.bf16.msra.mxu0 0
    %123 = vmatprep.subr.bf16.mxu0 0
    %124 = vmatpush1.bf16.msra.mxu0 0
    %125 = vmatprep.subr.bf16.mxu0 0
    %126 = vmatpush1.bf16.msra.mxu0 0
    %127 = vmatprep.subr.bf16.mxu0 0
    %128 = vmatpush1.bf16.msra.mxu0 0
    %129 = vmatprep.subr.bf16.mxu0 0
    %130 = vmatpush1.bf16.msra.mxu0 0
    %131 = vmatprep.subr.bf16.mxu0 0
    %132 = vmatpush1.bf16.msra.mxu0 0
    %133 = vmatprep.subr.bf16.mxu0 0
    %134 = vmatpush1.bf16.msra.mxu0 0
    %135 = vmatprep.subr.bf16.mxu0 0
    %136 = vmatpush1.bf16.msra.mxu0 0
    %137 = vmatprep.subr.bf16.mxu0 0
    %138 = vmatpush1.bf16.msra.mxu0 0
    %139 = vmatprep.subr.bf16.mxu0 0
    %140 = vmatpush1.bf16.msra.mxu0 0
    %141 = vmatprep.mubr.bf16.mxu0 0
    %142 = vmatmul.mubr.bf16.gmra.mrb[0].mxu0 %v107
    %v143 = vpop.f32.mrb[0].mxu0
    %v144 = vadd.f32 %v91, %v143
    %v145 = vpop.f32.mrb[0].mxu0
    %v146 = vpop.f32.mrb[0].mxu0
    %v147 = vpop.f32.mrb[0].mxu0
    %148 = vdwg.mxu0
    %v149 = vtanh.pop %v144
    %v150 = vpack.c.bf16 %v149, %v149
    %v151 = vld [vmem:[#allocation7] sm:$0xf]
    %v152 = vld [vmem:[#allocation7 + $0x4] sm:$0xf]
    %v153 = vld [vmem:[#allocation7 + $0x8] sm:$0xf]
    %v154 = vld [vmem:[#allocation7 + $0xc] sm:$0xf]
    %v155 = vld [vmem:[#allocation7 + $0x10] sm:$0xf]
    %v156 = vld [vmem:[#allocation7 + $0x14] sm:$0xf]
    %v157 = vld [vmem:[#allocation7 + $0x18] sm:$0xf]
    %v158 = vld [vmem:[#allocation7 + $0x1c] sm:$0xf]
    %v159 = vld [vmem:[#allocation7 + $0x20] sm:$0xf]
    %v160 = vld [vmem:[#allocation7 + $0x24] sm:$0xf]
    %v161 = vld [vmem:[#allocation7 + $0x28] sm:$0xf]
    %v162 = vld [vmem:[#allocation7 + $0x2c] sm:$0xf]
    %v163 = vld [vmem:[#allocation7 + $0x30] sm:$0xf]
    %v164 = vld [vmem:[#allocation7 + $0x34] sm:$0xf]
    %v165 = vld [vmem:[#allocation7 + $0x38] sm:$0xf]
    %v166 = vld [vmem:[#allocation7 + $0x3c] sm:$0xf]
    %v167 = vld [vmem:[%s4] sm:$0x1]
    %v169 = vlaneseq
    %v170 = vshrl.u32 %v169, 7
    %v171 = vsub.s32 0, %v170
    %v172 = vrot.slane %v167, %v171
    %v190 = vunpack.c.l.b16 %v151
    %v191 = vunpack.c.l.b16 %v152
    %v192 = vunpack.c.l.b16 %v153
    %v193 = vunpack.c.l.b16 %v154
    %v194 = vunpack.c.l.b16 %v155
    %v195 = vunpack.c.l.b16 %v156
    %v196 = vunpack.c.l.b16 %v157
    %v197 = vunpack.c.l.b16 %v158
    %v198 = vunpack.c.l.b16 %v159
    %v199 = vunpack.c.l.b16 %v160
    %v200 = vunpack.c.l.b16 %v161
    %v201 = vunpack.c.l.b16 %v162
    %v202 = vunpack.c.l.b16 %v163
    %v203 = vunpack.c.l.b16 %v164
    %v204 = vunpack.c.l.b16 %v165
    %v205 = vunpack.c.l.b16 %v166
    %v206 = vpack.c.b16 %v191, %v190
    %v207 = vpack.c.b16 %v193, %v192
    %v208 = vpack.c.b16 %v195, %v194
    %v209 = vpack.c.b16 %v197, %v196
    %v210 = vpack.c.b16 %v199, %v198
    %v211 = vpack.c.b16 %v201, %v200
    %v212 = vpack.c.b16 %v203, %v202
    %v213 = vpack.c.b16 %v205, %v204
    %222 = vmatprep.subr.bf16.mxu0 0
    %223 = vmatpush1.bf16.msra.mxu0 %v206
    %224 = vmatprep.subr.bf16.mxu0 0
    %225 = vmatpush1.bf16.msra.mxu0 %v207
    %226 = vmatprep.subr.bf16.mxu0 0
    %227 = vmatpush1.bf16.msra.mxu0 %v208
    %228 = vmatprep.subr.bf16.mxu0 0
    %229 = vmatpush1.bf16.msra.mxu0 %v209
    %230 = vmatprep.subr.bf16.mxu0 0
    %231 = vmatpush1.bf16.msra.mxu0 %v210
    %232 = vmatprep.subr.bf16.mxu0 0
    %233 = vmatpush1.bf16.msra.mxu0 %v211
    %234 = vmatprep.subr.bf16.mxu0 0
    %235 = vmatpush1.bf16.msra.mxu0 %v212
    %236 = vmatprep.subr.bf16.mxu0 0
    %237 = vmatpush1.bf16.msra.mxu0 %v213
    %238 = vmatprep.subr.bf16.mxu0 0
    %239 = vmatpush1.bf16.msra.mxu0 0
    %240 = vmatprep.subr.bf16.mxu0 0
    %241 = vmatpush1.bf16.msra.mxu0 0
    %242 = vmatprep.subr.bf16.mxu0 0
    %243 = vmatpush1.bf16.msra.mxu0 0
    %244 = vmatprep.subr.bf16.mxu0 0
    %245 = vmatpush1.bf16.msra.mxu0 0
    %246 = vmatprep.subr.bf16.mxu0 0
    %247 = vmatpush1.bf16.msra.mxu0 0
    %248 = vmatprep.subr.bf16.mxu0 0
    %249 = vmatpush1.bf16.msra.mxu0 0
    %250 = vmatprep.subr.bf16.mxu0 0
    %251 = vmatpush1.bf16.msra.mxu0 0
    %252 = vmatprep.subr.bf16.mxu0 0
    %253 = vmatpush1.bf16.msra.mxu0 0
    %254 = vmatprep.mubr.bf16.mxu0 0
    %255 = vmatmul.mubr.bf16.gmra.mrb[0].mxu0 %v150
    %v256 = vpop.f32.mrb[0].mxu0
    %v257 = vadd.f32 %v172, %v256
    %v258 = vpop.f32.mrb[0].mxu0
    %v259 = vpop.f32.mrb[0].mxu0
    %v260 = vpop.f32.mrb[0].mxu0
    %261 = vdwg.mxu0
    %v262 = vtanh.pop %v257
    %v263 = vpack.c.bf16 %v262, %v262
    %v264 = vld [vmem:[#allocation8] sm:$0xf]
    %v265 = vld [vmem:[#allocation8 + $0x4] sm:$0xf]
    %v266 = vld [vmem:[#allocation8 + $0x8] sm:$0xf]
    %v267 = vld [vmem:[#allocation8 + $0xc] sm:$0xf]
    %v268 = vld [vmem:[#allocation8 + $0x10] sm:$0xf]
    %v269 = vld [vmem:[#allocation8 + $0x14] sm:$0xf]
    %v270 = vld [vmem:[#allocation8 + $0x18] sm:$0xf]
    %v271 = vld [vmem:[#allocation8 + $0x1c] sm:$0xf]
    %v272 = vld [vmem:[#allocation8 + $0x20] sm:$0xf]
    %v273 = vld [vmem:[#allocation8 + $0x24] sm:$0xf]
    %v274 = vld [vmem:[#allocation8 + $0x28] sm:$0xf]
    %v275 = vld [vmem:[#allocation8 + $0x2c] sm:$0xf]
    %v276 = vld [vmem:[#allocation8 + $0x30] sm:$0xf]
    %v277 = vld [vmem:[#allocation8 + $0x34] sm:$0xf]
    %v278 = vld [vmem:[#allocation8 + $0x38] sm:$0xf]
    %v279 = vld [vmem:[#allocation8 + $0x3c] sm:$0xf]
    %v280 = vld [vmem:[%s6] sm:$0x1]
    %v282 = vlaneseq
    %v283 = vshrl.u32 %v282, 7
    %v284 = vsub.s32 0, %v283
    %v285 = vrot.slane %v280, %v284
    %v303 = vunpack.c.l.b16 %v264
    %v304 = vunpack.c.l.b16 %v265
    %v305 = vunpack.c.l.b16 %v266
    %v306 = vunpack.c.l.b16 %v267
    %v307 = vunpack.c.l.b16 %v268
    %v308 = vunpack.c.l.b16 %v269
    %v309 = vunpack.c.l.b16 %v270
    %v310 = vunpack.c.l.b16 %v271
    %v311 = vunpack.c.l.b16 %v272
    %v312 = vunpack.c.l.b16 %v273
    %v313 = vunpack.c.l.b16 %v274
    %v314 = vunpack.c.l.b16 %v275
    %v315 = vunpack.c.l.b16 %v276
    %v316 = vunpack.c.l.b16 %v277
    %v317 = vunpack.c.l.b16 %v278
    %v318 = vunpack.c.l.b16 %v279
    %v319 = vpack.c.b16 %v304, %v303
    %v320 = vpack.c.b16 %v306, %v305
    %v321 = vpack.c.b16 %v308, %v307
    %v322 = vpack.c.b16 %v310, %v309
    %v323 = vpack.c.b16 %v312, %v311
    %v324 = vpack.c.b16 %v314, %v313
    %v325 = vpack.c.b16 %v316, %v315
    %v326 = vpack.c.b16 %v318, %v317
    %335 = vmatprep.subr.bf16.mxu0 0
    %336 = vmatpush1.bf16.msra.mxu0 %v319
    %337 = vmatprep.subr.bf16.mxu0 0
    %338 = vmatpush1.bf16.msra.mxu0 %v320
    %339 = vmatprep.subr.bf16.mxu0 0
    %340 = vmatpush1.bf16.msra.mxu0 %v321
    %341 = vmatprep.subr.bf16.mxu0 0
    %342 = vmatpush1.bf16.msra.mxu0 %v322
    %343 = vmatprep.subr.bf16.mxu0 0
    %344 = vmatpush1.bf16.msra.mxu0 %v323
    %345 = vmatprep.subr.bf16.mxu0 0
    %346 = vmatpush1.bf16.msra.mxu0 %v324
    %347 = vmatprep.subr.bf16.mxu0 0
    %348 = vmatpush1.bf16.msra.mxu0 %v325
    %349 = vmatprep.subr.bf16.mxu0 0
    %350 = vmatpush1.bf16.msra.mxu0 %v326
    %351 = vmatprep.subr.bf16.mxu0 0
    %352 = vmatpush1.bf16.msra.mxu0 0
    %353 = vmatprep.subr.bf16.mxu0 0
    %354 = vmatpush1.bf16.msra.mxu0 0
    %355 = vmatprep.subr.bf16.mxu0 0
    %356 = vmatpush1.bf16.msra.mxu0 0
    %357 = vmatprep.subr.bf16.mxu0 0
    %358 = vmatpush1.bf16.msra.mxu0 0
    %359 = vmatprep.subr.bf16.mxu0 0
    %360 = vmatpush1.bf16.msra.mxu0 0
    %361 = vmatprep.subr.bf16.mxu0 0
    %362 = vmatpush1.bf16.msra.mxu0 0
    %363 = vmatprep.subr.bf16.mxu0 0
    %364 = vmatpush1.bf16.msra.mxu0 0
    %365 = vmatprep.subr.bf16.mxu0 0
    %366 = vmatpush1.bf16.msra.mxu0 0
    %367 = vmatprep.mubr.bf16.mxu0 0
    %368 = vmatmul.mubr.bf16.gmra.mrb[0].mxu0 %v263
    %v369 = vpop.f32.mrb[0].mxu0
    %v370 = vadd.f32 %v285, %v369
    %v371 = vpop.f32.mrb[0].mxu0
    %v372 = vpop.f32.mrb[0].mxu0
    %v373 = vpop.f32.mrb[0].mxu0
    %374 = vdwg.mxu0
    %375 = vst [vmem:[#allocation10] sm:$0xff] %v370
    // Predicated region
    $region46: #{tpu_custom_call.1} parent=1 // pred_check
      _
    $region47: #{tpu_custom_call.1} parent=1 // pred_check_branch
      %377 = sbr.rel (0) target = $region49
    $region48: #{tpu_custom_call.1} parent=1 // pred_region
      %s379 = ssub.s32 128, 128
      %380 = vsyncadd [#allocation4], %s379
      %s382 = sshll.u32 [#allocation10], 4
      %s383 = int_to_ptr.vmem [resolvable:$true] %s382
      %385 = dma.vmem_to_hbm [thread:$0]  %s383, 128, %s7, [#allocation4]
    $region49: #{tpu_custom_call.1} parent=1 // pred_fallthru
      _
    // Predicated region
    $region50: #{tpu_custom_call.1} parent=1 // pred_check
      _
    $region51: #{tpu_custom_call.1} parent=1 // pred_check_branch
      %387 = sbr.rel (0) target = $region53
    $region52: #{tpu_custom_call.1} parent=1 // pred_region
      %388 = dma.done [#allocation4], 128
    $region53: #{tpu_custom_call.1} parent=1 // pred_fallthru
      _
    %389 = vsyncpa [#allocation3], 1
    %390 = vsyncpa [#allocation6], 1
    %391 = vsyncpa [#allocation9], 1
    %392 = vsyncpa [#allocation4], 1

</llo_original>
